<compile_context>
chip_gen: v5e
topology: v5e:2x2
jax: 0.10.0
libtpu: 0.0.40
codegen_flags: <defaults>
</compile_context>

<pallas_src>
import functools

import jax
import jax.numpy as jnp
from jax import lax
from jax.experimental import pallas as pl
from jax.experimental.pallas import tpu as pltpu


# ----------------------------------------------------------------------------- kernel
def _attentive_pooling_kernel(a_len_ref, b_len_ref, a_ref, b_ref, u_ref,
                              oa_ref, ob_ref, *, bblk, la, lb):
    """One grid step = `bblk` batch elements.

    a_len_ref / b_len_ref : (pad_bsz,) int32 SMEM (scalar prefetch)
    a_ref : (bblk, dim_A, La)  native layout (no wrapper transpose)
    b_ref : (bblk, dim_B, Lb)  native layout
    u_ref : (dim_A, dim_B)     resident (constant index_map), matmul dtype
    oa_ref: (1, bblk, dim_A)   lane-dense row block
    ob_ref: (1, bblk, dim_B)
    """
    base = pl.program_id(0) * bblk
    u = u_ref[...]

    # In-kernel (XLU) transpose of each A slice, then ONE fused MXU matmul with
    # M = bblk * La for the whole batch block.
    a_t = [jnp.transpose(a_ref[i], (1, 0)) for i in range(bblk)]       # (La, dim_A)
    a2d = a_t[0] if bblk == 1 else jnp.concatenate(a_t, axis=0)        # (bblk*La, dim_A)
    au2d = jnp.dot(a2d, u, preferred_element_type=jnp.float32)         # (bblk*La, dim_B)
    au2d = au2d.astype(b_ref.dtype)      # bf16 inputs -> second matmul at bf16 rate

    # Loop-invariant index grids for the in-kernel 0/-inf length mask.
    row_ids = lax.broadcasted_iota(jnp.int32, (la, lb), 0)
    col_ids = lax.broadcasted_iota(jnp.int32, (la, lb), 1)
    neg_inf = jnp.float32(-jnp.inf)

    oa_rows, ob_rows = [], []
    for i in range(bblk):                 # bblk is small & static -> unrolled
        a_len = a_len_ref[base + i]       # cheap SMEM scalar reads
        b_len = b_len_ref[base + i]
        b_i = b_ref[i]                    # (dim_B, Lb) native

        au_i = au2d[i * la:(i + 1) * la, :]                             # (La, dim_B)
        align = jnp.dot(au_i, b_i, preferred_element_type=jnp.float32)  # (La, Lb)
        valid = (row_ids < a_len) & (col_ids < b_len)
        align = jnp.where(valid, jnp.tanh(align), neg_inf)              # tanh + 0/-inf

        # ---- modality A: max over Lb, softmax over La, VPU pooling -> (1, dim_A)
        sA = jnp.max(align, axis=1, keepdims=True)                      # (La, 1)
        eA = jnp.exp(sA - jnp.max(sA, axis=0, keepdims=True))           # masked rows -> 0
        pA = eA / jnp.sum(eA, axis=0, keepdims=True)                    # exact divide
        oa_rows.append(jnp.sum(a_t[i] * pA, axis=0, keepdims=True))     # (1, dim_A)

        # ---- modality B: max over La, softmax over Lb, M=1 MXU matmul on native B
        sB = jnp.max(align, axis=0, keepdims=True)                      # (1, Lb)
        eB = jnp.exp(sB - jnp.max(sB, axis=1, keepdims=True))           # masked cols -> 0
        pB = eB / jnp.sum(eB, axis=1, keepdims=True)                    # (1, Lb)
        ob_rows.append(
            lax.dot_general(pB.astype(b_i.dtype), b_i,
                            (((1,), (1,)), ((), ())),
                            preferred_element_type=jnp.float32))        # (1, dim_B)

    oa = oa_rows[0] if bblk == 1 else jnp.concatenate(oa_rows, axis=0)  # (bblk, dim_A)
    ob = ob_rows[0] if bblk == 1 else jnp.concatenate(ob_rows, axis=0)  # (bblk, dim_B)
    oa_ref[0] = oa.astype(oa_ref.dtype)
    ob_ref[0] = ob.astype(ob_ref.dtype)


# ----------------------------------------------------------------------------- wrapper
def _choose_batch_block(bsz, dim_A, La, dim_B, Lb, itemsize):
    # Per-batch-element VMEM: double-buffered input tiles + f32 temporaries
    # (a_t, au, align).  Conservative 12 MiB budget keeps us well inside the
    # 32 MiB scoped default on every generation (incl. v7x's 64 MiB physical).
    per_elem = (2 * (La * dim_A + Lb * dim_B) * itemsize
                + 4 * (La * dim_A + La * dim_B + La * Lb))
    budget = 12 * 1024 * 1024
    bblk = max(1, min(8, bsz, budget // max(per_elem, 1)))
    if bsz >= 2:                          # keep grid length >= 2 (both v7x TCs busy)
        bblk = min(bblk, max(1, bsz // 2))
    return bblk


def attentive_pooling_forward(input_A, input_B, U,
                              input_A_lens=None, input_B_lens=None):
    """input_A: (bsz, dim_A, La), input_B: (bsz, dim_B, Lb), U: (dim_A, dim_B).
    input_A_lens / input_B_lens: optional per-batch valid lengths (int).
    Returns (out_A: (bsz, dim_A), out_B: (bsz, dim_B))."""
    bsz, dim_A, La = input_A.shape
    bsz_b, dim_B, Lb = input_B.shape
    assert bsz == bsz_b, "input_A and input_B must have same bsz"
    assert U.shape == (dim_A, dim_B)

    a_lens = (jnp.full((bsz,), La, jnp.int32) if input_A_lens is None
              else jnp.asarray(input_A_lens, jnp.int32).reshape(bsz))
    b_lens = (jnp.full((bsz,), Lb, jnp.int32) if input_B_lens is None
              else jnp.asarray(input_B_lens, jnp.int32).reshape(bsz))

    itemsize = jnp.dtype(input_A.dtype).itemsize
    bblk = _choose_batch_block(bsz, dim_A, La, dim_B, Lb, itemsize)
    nblk = -(-bsz // bblk)
    pad_bsz = nblk * bblk
    if pad_bsz != bsz:                     # pad batch; padded rows use full lengths
        pad = pad_bsz - bsz                # (all-zero inputs -> finite softmax, sliced off)
        input_A = jnp.pad(input_A, ((0, pad), (0, 0), (0, 0)))
        input_B = jnp.pad(input_B, ((0, pad), (0, 0), (0, 0)))
        a_lens = jnp.pad(a_lens, (0, pad), constant_values=La)
        b_lens = jnp.pad(b_lens, (0, pad), constant_values=Lb)

    # Pre-cast U to the matmul dtype so its resident VMEM block / one-time DMA
    # matches the activation dtype (halved when activations are bf16).
    u = U.astype(input_A.dtype)

    kernel = functools.partial(_attentive_pooling_kernel, bblk=bblk, la=La, lb=Lb)

    flops = int(pad_bsz * (2 * La * dim_A * dim_B + 2 * La * Lb * dim_B
                           + 2 * La * dim_A + 2 * Lb * dim_B))
    transcendentals = int(pad_bsz * (La * Lb + La + Lb))
    bytes_accessed = int(itemsize * (pad_bsz * (La * dim_A + Lb * dim_B
                                                + dim_A + dim_B) + dim_A * dim_B)
                         + 8 * pad_bsz)

    out_A, out_B = pl.pallas_call(
        kernel,
        out_shape=(jax.ShapeDtypeStruct((nblk, bblk, dim_A), input_A.dtype),
                   jax.ShapeDtypeStruct((nblk, bblk, dim_B), input_B.dtype)),
        grid_spec=pltpu.PrefetchScalarGridSpec(
            num_scalar_prefetch=2,         # a_lens, b_lens land in SMEM
            grid=(nblk,),
            in_specs=[
                pl.BlockSpec((bblk, dim_A, La), lambda i, *_: (i, 0, 0)),
                pl.BlockSpec((bblk, dim_B, Lb), lambda i, *_: (i, 0, 0)),
                pl.BlockSpec((dim_A, dim_B), lambda i, *_: (0, 0)),   # resident U
            ],
            out_specs=(
                pl.BlockSpec((1, bblk, dim_A), lambda i, *_: (i, 0, 0)),
                pl.BlockSpec((1, bblk, dim_B), lambda i, *_: (i, 0, 0)),
            ),
        ),
        compiler_params=pltpu.CompilerParams(dimension_semantics=("parallel",)),
        cost_estimate=pl.CostEstimate(flops=flops, transcendentals=transcendentals,
                                      bytes_accessed=bytes_accessed),
    )(a_lens, b_lens, input_A, input_B, u)

    return (out_A.reshape(pad_bsz, dim_A)[:bsz],
            out_B.reshape(pad_bsz, dim_B)[:bsz])


def generate_input_msk(input_A_lens=None, input_B_lens=None, max_Alen=1, max_Blen=1):
    """JAX equivalent of AttentivePoolingLayer.generate_input_msk (0 on, -inf off)."""
    if input_A_lens is None and input_B_lens is None:
        raise ValueError("input_A_lens and input_B_lens cannot both be None")
    lens = input_A_lens if input_A_lens is not None else input_B_lens
    bsz = lens.shape[0]
    msk = jnp.zeros((bsz, max_Alen, max_Blen), jnp.float32)
    if input_A_lens is not None:
        a_pos = jnp.arange(max_Alen)[None, :, None]
        msk = jnp.where(a_pos >= jnp.asarray(input_A_lens).reshape(bsz, 1, 1),
                        -jnp.inf, msk)
    if input_B_lens is not None:
        b_pos = jnp.arange(max_Blen)[None, None, :]
        msk = jnp.where(b_pos >= jnp.asarray(input_B_lens).reshape(bsz, 1, 1),
                        -jnp.inf, msk)
    return msk


class AttentivePoolingLayer:
    """Thin parameter holder mirroring the PyTorch module (forward only)."""

    def __init__(self, dim_A, dim_B, degraded=False, key=None):
        self.dim_A, self.dim_B, self.degraded = dim_A, dim_B, degraded
        if not degraded:
            key = jax.random.PRNGKey(0) if key is None else key
            self.U = jax.random.normal(key, (dim_A, dim_B), dtype=jnp.float32)
        else:
            assert dim_A == dim_B
            self.U = jnp.eye(dim_A, dtype=jnp.float32)

    def generate_input_msk(self, input_A_lens=None, input_B_lens=None,
                           max_Alen=1, max_Blen=1):
        return generate_input_msk(input_A_lens, input_B_lens, max_Alen, max_Blen)

    def __call__(self, input_A, input_B, input_msk=None,
                 input_A_lens=None, input_B_lens=None):
        if input_msk is not None and input_A_lens is None and input_B_lens is None:
            # The fused kernel builds the 0/-inf mask in-kernel from per-batch
            # lengths (scalar prefetch) instead of DMAing a (bsz, La, Lb) f32 mask.
            # Recover lengths from the rectangular mask produced by generate_input_msk.
            # TODO(synk): arbitrary non-rectangular masks are not supported by the
            # fused in-kernel masking path.
            bsz, _, La = input_A.shape
            Lb = input_B.shape[2]
            m = jnp.broadcast_to(jnp.asarray(input_msk, jnp.float32), (bsz, La, Lb))
            finite = jnp.isfinite(m)
            input_A_lens = jnp.sum(jnp.any(finite, axis=2), axis=1).astype(jnp.int32)
            input_B_lens = jnp.sum(jnp.any(finite, axis=1), axis=1).astype(jnp.int32)
        return attentive_pooling_forward(input_A, input_B, self.U,
                                         input_A_lens, input_B_lens)


# ----------------------------------------------------------------------------- reference
def _reference(input_A, input_B, U, msk=None):
    """Pure-JAX mirror of the PyTorch forward for correctness checking."""
    At = jnp.transpose(input_A, (0, 2, 1))                       # (bsz, La, dim_A)
    align = jnp.tanh(jnp.einsum("bad,bdk->bak", At @ U, input_B))
    if msk is not None:
        align = align + msk
    sA = jax.nn.softmax(jnp.max(align, axis=2), axis=-1)         # (bsz, La)
    sB = jax.nn.softmax(jnp.max(align, axis=1), axis=-1)         # (bsz, Lb)
    oA = jnp.einsum("bda,ba->bd", input_A, sA)
    oB = jnp.einsum("bdk,bk->bd", input_B, sB)
    return oA, oB


if __name__ == "__main__":
    bsz, dim_A, dim_B, La, Lb = 4, 32, 48, 8, 12
    key = jax.random.PRNGKey(0)
    kA, kB, kU = jax.random.split(key, 3)
    input_A = jax.random.normal(kA, (bsz, dim_A, La), dtype=jnp.float32)
    input_B = jax.random.normal(kB, (bsz, dim_B, Lb), dtype=jnp.float32)

    layer = AttentivePoolingLayer(dim_A, dim_B, degraded=False, key=kU)

    # --- unmasked forward ------------------------------------------------------
    out_A, out_B = layer(input_A, input_B)
    jax.block_until_ready((out_A, out_B))
    ref_A, ref_B = _reference(input_A, input_B, layer.U, None)
    assert out_A.shape == (bsz, dim_A) and out_B.shape == (bsz, dim_B)
    assert jnp.allclose(out_A, ref_A, atol=2e-3, rtol=2e-3)
    assert jnp.allclose(out_B, ref_B, atol=2e-3, rtol=2e-3)

    # --- masked forward (variable lengths, 0/-inf mask semantics) ---------------
    a_lens = jnp.array([[La], [5], [3], [7]], dtype=jnp.int32)
    b_lens = jnp.array([[Lb], [6], [Lb], [4]], dtype=jnp.int32)
    msk = layer.generate_input_msk(a_lens, b_lens, La, Lb)
    ref_Am, ref_Bm = _reference(input_A, input_B, layer.U, msk)

    # (a) fast path: per-batch lengths -> in-kernel mask (no HBM mask traffic)
    out_Am, out_Bm = layer(input_A, input_B, input_A_lens=a_lens, input_B_lens=b_lens)
    jax.block_until_ready((out_Am, out_Bm))
    assert jnp.allclose(out_Am, ref_Am, atol=2e-3, rtol=2e-3)
    assert jnp.allclose(out_Bm, ref_Bm, atol=2e-3, rtol=2e-3)

    # (b) PyTorch-style explicit 0/-inf mask (decoded to lengths in the wrapper)
    out_Am2, out_Bm2 = layer(input_A, input_B, input_msk=msk)
    jax.block_until_ready((out_Am2, out_Bm2))
    assert jnp.allclose(out_Am2, ref_Am, atol=2e-3, rtol=2e-3)
    assert jnp.allclose(out_Bm2, ref_Bm, atol=2e-3, rtol=2e-3)

    print("KERNEL_OK")
</pallas_src>

<mosaic_0001>
module attributes {stable_mosaic.version = 11 : i64} {
  func.func @_attentive_pooling_kernel(%arg0: i32, %arg1: memref<4xi32, #tpu.memory_space<smem>>, %arg2: memref<4xi32, #tpu.memory_space<smem>>, %arg3: memref<2x32x8xf32, #tpu.memory_space<vmem>>, %arg4: memref<2x48x12xf32, #tpu.memory_space<vmem>>, %arg5: memref<32x48xf32, #tpu.memory_space<vmem>>, %arg6: memref<1x2x32xf32, #tpu.memory_space<vmem>>, %arg7: memref<1x2x48xf32, #tpu.memory_space<vmem>>) attributes {dimension_semantics = [#tpu.dimension_semantics<parallel>], iteration_bounds = array<i64: 2>, scalar_prefetch = 2 : i64, scratch_operands = 0 : i64, tpu.core_type = #tpu.core_type<tc>, window_params = [{transform_indices = @transform_0, window_bounds = array<i64: 2, 32, 8>}, {transform_indices = @transform_1, window_bounds = array<i64: 2, 48, 12>}, {pipeline_mode = #tpu.pipeline_mode<synchronous>, transform_indices = @transform_2, window_bounds = array<i64: 32, 48>}, {transform_indices = @transform_3, window_bounds = array<i64: 1, 2, 32>}, {transform_indices = @transform_4, window_bounds = array<i64: 1, 2, 48>}]} {
    %c2_i32 = arith.constant 2 : i32
    %0 = arith.muli %arg0, %c2_i32 : i32
    %c0 = arith.constant 0 : index
    %c0_0 = arith.constant 0 : index
    %1 = vector.load %arg5[%c0, %c0_0] : memref<32x48xf32, #tpu.memory_space<vmem>>, vector<32x48xf32>
    %c0_1 = arith.constant 0 : index
    %c0_2 = arith.constant 0 : index
    %c0_3 = arith.constant 0 : index
    %2 = vector.load %arg3[%c0_1, %c0_2, %c0_3] : memref<2x32x8xf32, #tpu.memory_space<vmem>>, vector<1x32x8xf32>
    %3 = vector.shape_cast %2 : vector<1x32x8xf32> to vector<32x8xf32>
    %4 = tpu.transpose %3, [1, 0] : vector<32x8xf32> -> vector<8x32xf32>
    %c1 = arith.constant 1 : index
    %c0_4 = arith.constant 0 : index
    %c0_5 = arith.constant 0 : index
    %5 = vector.load %arg3[%c1, %c0_4, %c0_5] : memref<2x32x8xf32, #tpu.memory_space<vmem>>, vector<1x32x8xf32>
    %6 = vector.shape_cast %5 : vector<1x32x8xf32> to vector<32x8xf32>
    %7 = tpu.transpose %6, [1, 0] : vector<32x8xf32> -> vector<8x32xf32>
    %8 = tpu.concatenate %4, %7 in 0 : vector<8x32xf32>, vector<8x32xf32> -> vector<16x32xf32>
    %cst = arith.constant dense<0.000000e+00> : vector<16x48xf32>
    %9 = tpu.matmul %8, %1, %cst {dimension_numbers = #tpu.dot_dimension_numbers<[1], [0], [0], [1], [0, 0, 1, 1], [], []>} : vector<16x32xf32>, vector<32x48xf32>, vector<16x48xf32> -> vector<16x48xf32>
    %10 = tpu.iota {dimensions = array<i32: 0>} : vector<8x12xi32>
    %11 = tpu.iota {dimensions = array<i32: 1>} : vector<8x12xi32>
    %c0_i32 = arith.constant 0 : i32
    %12 = arith.addi %0, %c0_i32 : i32
    %13 = arith.index_cast %12 : i32 to index
    %14 = memref.load %arg1[%13] : memref<4xi32, #tpu.memory_space<smem>>
    %c0_i32_6 = arith.constant 0 : i32
    %15 = arith.addi %0, %c0_i32_6 : i32
    %16 = arith.index_cast %15 : i32 to index
    %17 = memref.load %arg2[%16] : memref<4xi32, #tpu.memory_space<smem>>
    %c0_7 = arith.constant 0 : index
    %c0_8 = arith.constant 0 : index
    %c0_9 = arith.constant 0 : index
    %18 = vector.load %arg4[%c0_7, %c0_8, %c0_9] : memref<2x48x12xf32, #tpu.memory_space<vmem>>, vector<1x48x12xf32>
    %19 = vector.shape_cast %18 : vector<1x48x12xf32> to vector<48x12xf32>
    %20 = vector.extract_strided_slice %9 {offsets = [0, 0], sizes = [8, 48], strides = [1, 1]} : vector<16x48xf32> to vector<8x48xf32>
    %cst_10 = arith.constant dense<0.000000e+00> : vector<8x12xf32>
    %21 = tpu.matmul %20, %19, %cst_10 {dimension_numbers = #tpu.dot_dimension_numbers<[1], [0], [0], [1], [0, 0, 1, 1], [], []>} : vector<8x48xf32>, vector<48x12xf32>, vector<8x12xf32> -> vector<8x12xf32>
    %22 = vector.broadcast %14 : i32 to vector<8x12xi32>
    %23 = arith.cmpi slt, %10, %22 : vector<8x12xi32>
    %24 = vector.broadcast %17 : i32 to vector<8x12xi32>
    %25 = arith.cmpi slt, %11, %24 : vector<8x12xi32>
    %26 = arith.andi %23, %25 : vector<8x12xi1>
    %27 = math.tanh %21 : vector<8x12xf32>
    %cst_11 = arith.constant 0xFF800000 : f32
    %28 = vector.broadcast %cst_11 : f32 to vector<8x12xf32>
    %29 = arith.select %26, %27, %28 : vector<8x12xi1>, vector<8x12xf32>
    %cst_12 = arith.constant dense<0xFF800000> : vector<8xf32>
    %30 = vector.multi_reduction <maximumf>, %29, %cst_12 [1] : vector<8x12xf32> to vector<8xf32>
    %31 = vector.shape_cast %30 : vector<8xf32> to vector<8x1xf32>
    %cst_13 = arith.constant dense<0xFF800000> : vector<1xf32>
    %32 = vector.multi_reduction <maximumf>, %31, %cst_13 [0] : vector<8x1xf32> to vector<1xf32>
    %33 = vector.shape_cast %32 : vector<1xf32> to vector<1x1xf32>
    %34 = vector.broadcast %33 : vector<1x1xf32> to vector<8x1xf32>
    %35 = arith.subf %31, %34 : vector<8x1xf32>
    %36 = math.exp %35 : vector<8x1xf32>
    %cst_14 = arith.constant dense<0.000000e+00> : vector<1xf32>
    %37 = vector.multi_reduction <add>, %36, %cst_14 [0] : vector<8x1xf32> to vector<1xf32>
    %38 = vector.shape_cast %37 : vector<1xf32> to vector<1x1xf32>
    %39 = vector.broadcast %38 : vector<1x1xf32> to vector<8x1xf32>
    %40 = arith.divf %36, %39 : vector<8x1xf32>
    %41 = vector.broadcast %40 : vector<8x1xf32> to vector<8x32xf32>
    %42 = arith.mulf %4, %41 : vector<8x32xf32>
    %cst_15 = arith.constant dense<0.000000e+00> : vector<32xf32>
    %43 = vector.multi_reduction <add>, %42, %cst_15 [0] : vector<8x32xf32> to vector<32xf32>
    %44 = vector.shape_cast %43 : vector<32xf32> to vector<1x32xf32>
    %cst_16 = arith.constant dense<0xFF800000> : vector<12xf32>
    %45 = vector.multi_reduction <maximumf>, %29, %cst_16 [0] : vector<8x12xf32> to vector<12xf32>
    %46 = vector.shape_cast %45 : vector<12xf32> to vector<1x12xf32>
    %cst_17 = arith.constant dense<0xFF800000> : vector<1xf32>
    %47 = vector.multi_reduction <maximumf>, %46, %cst_17 [1] : vector<1x12xf32> to vector<1xf32>
    %48 = vector.shape_cast %47 : vector<1xf32> to vector<1x1xf32>
    %49 = vector.broadcast %48 : vector<1x1xf32> to vector<1x12xf32>
    %50 = arith.subf %46, %49 : vector<1x12xf32>
    %51 = math.exp %50 : vector<1x12xf32>
    %cst_18 = arith.constant dense<0.000000e+00> : vector<1xf32>
    %52 = vector.multi_reduction <add>, %51, %cst_18 [1] : vector<1x12xf32> to vector<1xf32>
    %53 = vector.shape_cast %52 : vector<1xf32> to vector<1x1xf32>
    %54 = vector.broadcast %53 : vector<1x1xf32> to vector<1x12xf32>
    %55 = arith.divf %51, %54 : vector<1x12xf32>
    %cst_19 = arith.constant dense<0.000000e+00> : vector<1x48xf32>
    %56 = tpu.matmul %55, %19, %cst_19 {dimension_numbers = #tpu.dot_dimension_numbers<[1], [1], [0], [0], [0, 0, 1, 0], [], []>} : vector<1x12xf32>, vector<48x12xf32>, vector<1x48xf32> -> vector<1x48xf32>
    %c1_i32 = arith.constant 1 : i32
    %57 = arith.addi %0, %c1_i32 : i32
    %58 = arith.index_cast %57 : i32 to index
    %59 = memref.load %arg1[%58] : memref<4xi32, #tpu.memory_space<smem>>
    %c1_i32_20 = arith.constant 1 : i32
    %60 = arith.addi %0, %c1_i32_20 : i32
    %61 = arith.index_cast %60 : i32 to index
    %62 = memref.load %arg2[%61] : memref<4xi32, #tpu.memory_space<smem>>
    %c1_21 = arith.constant 1 : index
    %c0_22 = arith.constant 0 : index
    %c0_23 = arith.constant 0 : index
    %63 = vector.load %arg4[%c1_21, %c0_22, %c0_23] : memref<2x48x12xf32, #tpu.memory_space<vmem>>, vector<1x48x12xf32>
    %64 = vector.shape_cast %63 : vector<1x48x12xf32> to vector<48x12xf32>
    %65 = vector.extract_strided_slice %9 {offsets = [8, 0], sizes = [8, 48], strides = [1, 1]} : vector<16x48xf32> to vector<8x48xf32>
    %cst_24 = arith.constant dense<0.000000e+00> : vector<8x12xf32>
    %66 = tpu.matmul %65, %64, %cst_24 {dimension_numbers = #tpu.dot_dimension_numbers<[1], [0], [0], [1], [0, 0, 1, 1], [], []>} : vector<8x48xf32>, vector<48x12xf32>, vector<8x12xf32> -> vector<8x12xf32>
    %67 = vector.broadcast %59 : i32 to vector<8x12xi32>
    %68 = arith.cmpi slt, %10, %67 : vector<8x12xi32>
    %69 = vector.broadcast %62 : i32 to vector<8x12xi32>
    %70 = arith.cmpi slt, %11, %69 : vector<8x12xi32>
    %71 = arith.andi %68, %70 : vector<8x12xi1>
    %72 = math.tanh %66 : vector<8x12xf32>
    %cst_25 = arith.constant 0xFF800000 : f32
    %73 = vector.broadcast %cst_25 : f32 to vector<8x12xf32>
    %74 = arith.select %71, %72, %73 : vector<8x12xi1>, vector<8x12xf32>
    %cst_26 = arith.constant dense<0xFF800000> : vector<8xf32>
    %75 = vector.multi_reduction <maximumf>, %74, %cst_26 [1] : vector<8x12xf32> to vector<8xf32>
    %76 = vector.shape_cast %75 : vector<8xf32> to vector<8x1xf32>
    %cst_27 = arith.constant dense<0xFF800000> : vector<1xf32>
    %77 = vector.multi_reduction <maximumf>, %76, %cst_27 [0] : vector<8x1xf32> to vector<1xf32>
    %78 = vector.shape_cast %77 : vector<1xf32> to vector<1x1xf32>
    %79 = vector.broadcast %78 : vector<1x1xf32> to vector<8x1xf32>
    %80 = arith.subf %76, %79 : vector<8x1xf32>
    %81 = math.exp %80 : vector<8x1xf32>
    %cst_28 = arith.constant dense<0.000000e+00> : vector<1xf32>
    %82 = vector.multi_reduction <add>, %81, %cst_28 [0] : vector<8x1xf32> to vector<1xf32>
    %83 = vector.shape_cast %82 : vector<1xf32> to vector<1x1xf32>
    %84 = vector.broadcast %83 : vector<1x1xf32> to vector<8x1xf32>
    %85 = arith.divf %81, %84 : vector<8x1xf32>
    %86 = vector.broadcast %85 : vector<8x1xf32> to vector<8x32xf32>
    %87 = arith.mulf %7, %86 : vector<8x32xf32>
    %cst_29 = arith.constant dense<0.000000e+00> : vector<32xf32>
    %88 = vector.multi_reduction <add>, %87, %cst_29 [0] : vector<8x32xf32> to vector<32xf32>
    %89 = vector.shape_cast %88 : vector<32xf32> to vector<1x32xf32>
    %cst_30 = arith.constant dense<0xFF800000> : vector<12xf32>
    %90 = vector.multi_reduction <maximumf>, %74, %cst_30 [0] : vector<8x12xf32> to vector<12xf32>
    %91 = vector.shape_cast %90 : vector<12xf32> to vector<1x12xf32>
    %cst_31 = arith.constant dense<0xFF800000> : vector<1xf32>
    %92 = vector.multi_reduction <maximumf>, %91, %cst_31 [1] : vector<1x12xf32> to vector<1xf32>
    %93 = vector.shape_cast %92 : vector<1xf32> to vector<1x1xf32>
    %94 = vector.broadcast %93 : vector<1x1xf32> to vector<1x12xf32>
    %95 = arith.subf %91, %94 : vector<1x12xf32>
    %96 = math.exp %95 : vector<1x12xf32>
    %cst_32 = arith.constant dense<0.000000e+00> : vector<1xf32>
    %97 = vector.multi_reduction <add>, %96, %cst_32 [1] : vector<1x12xf32> to vector<1xf32>
    %98 = vector.shape_cast %97 : vector<1xf32> to vector<1x1xf32>
    %99 = vector.broadcast %98 : vector<1x1xf32> to vector<1x12xf32>
    %100 = arith.divf %96, %99 : vector<1x12xf32>
    %cst_33 = arith.constant dense<0.000000e+00> : vector<1x48xf32>
    %101 = tpu.matmul %100, %64, %cst_33 {dimension_numbers = #tpu.dot_dimension_numbers<[1], [1], [0], [0], [0, 0, 1, 0], [], []>} : vector<1x12xf32>, vector<48x12xf32>, vector<1x48xf32> -> vector<1x48xf32>
    %102 = tpu.concatenate %44, %89 in 0 : vector<1x32xf32>, vector<1x32xf32> -> vector<2x32xf32>
    %103 = tpu.concatenate %56, %101 in 0 : vector<1x48xf32>, vector<1x48xf32> -> vector<2x48xf32>
    %c0_34 = arith.constant 0 : index
    %c0_35 = arith.constant 0 : index
    %c0_36 = arith.constant 0 : index
    %104 = vector.load %arg6[%c0_34, %c0_35, %c0_36] : memref<1x2x32xf32, #tpu.memory_space<vmem>>, vector<1x2x32xf32>
    %105 = vector.shape_cast %104 : vector<1x2x32xf32> to vector<2x32xf32>
    %106 = vector.shape_cast %102 : vector<2x32xf32> to vector<1x2x32xf32>
    tpu.vector_store %arg6[%c0_34, %c0_35, %c0_36], %106 {strides = array<i32>} : memref<1x2x32xf32, #tpu.memory_space<vmem>>, vector<1x2x32xf32>,
    %c0_37 = arith.constant 0 : index
    %c0_38 = arith.constant 0 : index
    %c0_39 = arith.constant 0 : index
    %107 = vector.load %arg7[%c0_37, %c0_38, %c0_39] : memref<1x2x48xf32, #tpu.memory_space<vmem>>, vector<1x2x48xf32>
    %108 = vector.shape_cast %107 : vector<1x2x48xf32> to vector<2x48xf32>
    %109 = vector.shape_cast %103 : vector<2x48xf32> to vector<1x2x48xf32>
    tpu.vector_store %arg7[%c0_37, %c0_38, %c0_39], %109 {strides = array<i32>} : memref<1x2x48xf32, #tpu.memory_space<vmem>>, vector<1x2x48xf32>,
    return
  }
  func.func @transform_0(%arg0: i32, %arg1: memref<4xi32, #tpu.memory_space<smem>>, %arg2: memref<4xi32, #tpu.memory_space<smem>>) -> (i32, i32, i32) {
    %c0_i32 = arith.constant 0 : i32
    %c0_i32_0 = arith.constant 0 : i32
    %c0_i32_1 = arith.constant 0 : i32
    return %arg0, %c0_i32, %c0_i32_0 : i32, i32, i32
  }
  func.func @transform_1(%arg0: i32, %arg1: memref<4xi32, #tpu.memory_space<smem>>, %arg2: memref<4xi32, #tpu.memory_space<smem>>) -> (i32, i32, i32) {
    %c0_i32 = arith.constant 0 : i32
    %c0_i32_0 = arith.constant 0 : i32
    %c0_i32_1 = arith.constant 0 : i32
    return %arg0, %c0_i32, %c0_i32_0 : i32, i32, i32
  }
  func.func @transform_2(%arg0: i32, %arg1: memref<4xi32, #tpu.memory_space<smem>>, %arg2: memref<4xi32, #tpu.memory_space<smem>>) -> (i32, i32) {
    %c0_i32 = arith.constant 0 : i32
    %c0_i32_0 = arith.constant 0 : i32
    %c0_i32_1 = arith.constant 0 : i32
    return %c0_i32, %c0_i32_0 : i32, i32
  }
  func.func @transform_3(%arg0: i32, %arg1: memref<4xi32, #tpu.memory_space<smem>>, %arg2: memref<4xi32, #tpu.memory_space<smem>>) -> (i32, i32, i32) {
    %c0_i32 = arith.constant 0 : i32
    %c0_i32_0 = arith.constant 0 : i32
    %c0_i32_1 = arith.constant 0 : i32
    return %arg0, %c0_i32, %c0_i32_0 : i32, i32, i32
  }
  func.func @transform_4(%arg0: i32, %arg1: memref<4xi32, #tpu.memory_space<smem>>, %arg2: memref<4xi32, #tpu.memory_space<smem>>) -> (i32, i32, i32) {
    %c0_i32 = arith.constant 0 : i32
    %c0_i32_0 = arith.constant 0 : i32
    %c0_i32_1 = arith.constant 0 : i32
    return %arg0, %c0_i32, %c0_i32_0 : i32, i32, i32
  }
}

</mosaic_0001>

<llo_original>
// kernel: tpu_custom_call.1
$region0: #{tpu_custom_call.1}
  #allocation0 [shape = 'u32[]', space=smem, size = 0x4, offset = 0x4, fixed_abs, tag = 'smem constant byte address 0x4 - core index']
  #allocation1 [shape = 'u32[72,128]{1,0:T(1,128)}', space=vmem, size = 0x9000, scoped, tag = 'internal scratch']
  #allocation2 [shape = 's32[1]{0}', space=sflag, size = 0x4, scoped, tag = 'scoped memory for tpu_custom_call.1']
  #allocation3 [shape = 'u8[512]{0}', space=smem, size = 0x200, scoped, tag = 'prefetched SMEM operand 0']
  #allocation4 [shape = 'u8[512]{0}', space=smem, size = 0x200, scoped, tag = 'prefetched SMEM operand 1']
  %s0 = inlined_call_operand.vmem [shape: s32[4], index: 0, kind: input, shape index: {}]
  %s1 = inlined_call_operand.vmem [shape: s32[4], index: 1, kind: input, shape index: {}]
  %s2 = inlined_call_operand.vmem [shape: f32[4,32,8], index: 2, kind: input, shape index: {}]
  %s3 = inlined_call_operand.vmem [shape: f32[4,48,12], index: 3, kind: input, shape index: {}]
  %s4 = inlined_call_operand.vmem [shape: f32[32,48], index: 4, kind: input, shape index: {}]
  %s5 = inlined_call_operand.hbm [shape: f32[2,2,32], index: 5, kind: output, shape index: {0}]
  %s6 = inlined_call_operand.hbm [shape: f32[2,2,48], index: 6, kind: output, shape index: {1}]
  %7 = xla_tuple %s5, %s6
  %s8 = sld [smem:[#allocation0]]
  $region53: #{tpu_custom_call.1} parent=0
    _
  %s10 = ssub.s32 1, %s8
  %s11 = scalar_select 0, %s10, %s8
  %s13 = sshll.u32 %s0, 4
  %s14 = int_to_ptr.vmem [resolvable:$true] %s13
  %16 = dma.vmem_to_smem %s14, 16, [#allocation3], [#allocation2]
  %s18 = sshll.u32 %s1, 4
  %s19 = int_to_ptr.vmem [resolvable:$true] %s18
  %21 = dma.vmem_to_smem %s19, 16, [#allocation4], [#allocation2]
  %23 = dma.done [#allocation2], 32
  %24 = sfence
  $region1: #{tpu_custom_call.1} parent=0
    #allocation5 [shape = 'u8[2048]{0}', space=vmem, size = 0x800, scoped, tag = 'output window, operand 0']
    #allocation6 [shape = 's32[2]{0}', space=sflag, size = 0x8, scoped, tag = 'scoped memory for tpu_custom_call.1']
    #allocation7 [shape = 'u8[2048]{0}', space=vmem, size = 0x800, scoped, tag = 'output window, operand 1']
    #allocation8 [shape = 's32[2]{0}', space=sflag, size = 0x8, scoped, tag = 'scoped memory for tpu_custom_call.1']
    %25 = vsyncpa [#allocation6], 0
    %s26 = scalar_lea.sflag [#allocation6], 1
    %27 = vsyncpa %s26, 0
    %28 = vsyncpa [#allocation8], 0
    %s29 = scalar_lea.sflag [#allocation8], 1
    %30 = vsyncpa %s29, 0
    loop: start=0, step=1, limit=4
    $region2: #{tpu_custom_call.1} parent=1 // loop_pre_header
      _
    $region3: #{tpu_custom_call.1} parent=1 // loop_header
      %s32 = sphi 0, %s36
      %p33 = scmp.ge.s32.totalorder %s32, 4
      %s42 = sphi 0, %s44
      %s45 = sphi 0, %s42
      %s46 = sphi 0, %s45
      %s62 = sphi 0, %s46
      %s68 = sphi 0, %s70
      %s71 = sphi 0, %s68
      %s72 = sphi 0, %s71
      %s88 = sphi 0, %s72
      %s92 = sphi 0, %s92
      %s94 = sphi 0, %s92
      %s95 = sphi 0, %s94
      %s109 = sphi 0, %s95
      %s115 = sphi 0, %s117
      %s118 = sphi 0, %s115
      %s119 = sphi 0, %s118
      %s135 = sphi 0, %s119
      %s141 = sphi 0, %s143
      %s144 = sphi 0, %s141
      %s145 = sphi 0, %s144
      %s161 = sphi 0, %s145
    $region4: #{tpu_custom_call.1} parent=1 // loop_header_branch
      %35 = sbr.rel (%p33) target = $region8
    $region5: #{tpu_custom_call.1} parent=1 // loop_body
      %s37 = ssub.s32 %s32, 1
      %s38 = ssub.s32 %s32, 2
      %s39 = sadd.s32 %s32, 1
      %s40 = ssub.s32 %s32, %s39
      %p41 = scmp.eq.s32.totalorder %s40, 0
      %s43 = sadd.s32 %s42, 1
      %s44 = scalar_select %p41, %s42, %s43
      %p47 = pneg %p41
      %p48 = scmp.eq.s32.totalorder %s32, 1
      %p49 = por %p47, %p48
      %p50 = scmp.ne.s32.totalorder %s42, %s45
      %p51 = scmp.eq.s32.totalorder %s32, 0
      %p52 = por %p50, %p51
      %p53 = scmp.ne.s32.totalorder %s42, %s45
      %p54 = scmp.eq.s32.totalorder %s37, 1
      %p55 = por %p53, %p54
      %p56 = scmp.ne.s32.totalorder %s45, %s46
      %p57 = scmp.eq.s32.totalorder %s37, 0
      %p58 = por %p56, %p57
      %p59 = scmp.ne.s32.totalorder %s45, %s46
      %p60 = scmp.eq.s32.totalorder %s38, 1
      %p61 = por %p59, %p60
      %p63 = scmp.ne.s32.totalorder %s46, %s62
      %p64 = scmp.eq.s32.totalorder %s38, 0
      %p65 = por %p63, %p64
      %s66 = ssub.s32 %s32, %s39
      %p67 = scmp.eq.s32.totalorder %s66, 0
      %s69 = sadd.s32 %s68, 1
      %s70 = scalar_select %p67, %s68, %s69
      %p73 = pneg %p67
      %p74 = scmp.eq.s32.totalorder %s32, 1
      %p75 = por %p73, %p74
      %p76 = scmp.ne.s32.totalorder %s68, %s71
      %p77 = scmp.eq.s32.totalorder %s32, 0
      %p78 = por %p76, %p77
      %p79 = scmp.ne.s32.totalorder %s68, %s71
      %p80 = scmp.eq.s32.totalorder %s37, 1
      %p81 = por %p79, %p80
      %p82 = scmp.ne.s32.totalorder %s71, %s72
      %p83 = scmp.eq.s32.totalorder %s37, 0
      %p84 = por %p82, %p83
      %p85 = scmp.ne.s32.totalorder %s71, %s72
      %p86 = scmp.eq.s32.totalorder %s38, 1
      %p87 = por %p85, %p86
      %p89 = scmp.ne.s32.totalorder %s72, %s88
      %p90 = scmp.eq.s32.totalorder %s38, 0
      %p91 = por %p89, %p90
      %s93 = sadd.s32 %s92, 1
      %p96 = scmp.eq.s32.totalorder %s32, 1
      %p97 = scmp.ne.s32.totalorder %s92, %s94
      %p98 = scmp.eq.s32.totalorder %s32, 0
      %p99 = por %p97, %p98
      %p100 = scmp.ne.s32.totalorder %s92, %s94
      %p101 = scmp.eq.s32.totalorder %s37, 1
      %p102 = por %p100, %p101
      %p103 = scmp.ne.s32.totalorder %s94, %s95
      %p104 = scmp.eq.s32.totalorder %s37, 0
      %p105 = por %p103, %p104
      %p106 = scmp.ne.s32.totalorder %s94, %s95
      %p107 = scmp.eq.s32.totalorder %s38, 1
      %p108 = por %p106, %p107
      %p110 = scmp.ne.s32.totalorder %s95, %s109
      %p111 = scmp.eq.s32.totalorder %s38, 0
      %p112 = por %p110, %p111
      %s113 = ssub.s32 %s32, %s39
      %p114 = scmp.eq.s32.totalorder %s113, 0
      %s116 = sadd.s32 %s115, 1
      %s117 = scalar_select %p114, %s115, %s116
      %p120 = pneg %p114
      %p121 = scmp.eq.s32.totalorder %s32, 1
      %p122 = por %p120, %p121
      %p123 = scmp.ne.s32.totalorder %s115, %s118
      %p124 = scmp.eq.s32.totalorder %s32, 0
      %p125 = por %p123, %p124
      %p126 = scmp.ne.s32.totalorder %s115, %s118
      %p127 = scmp.eq.s32.totalorder %s37, 1
      %p128 = por %p126, %p127
      %p129 = scmp.ne.s32.totalorder %s118, %s119
      %p130 = scmp.eq.s32.totalorder %s37, 0
      %p131 = por %p129, %p130
      %p132 = scmp.ne.s32.totalorder %s118, %s119
      %p133 = scmp.eq.s32.totalorder %s38, 1
      %p134 = por %p132, %p133
      %p136 = scmp.ne.s32.totalorder %s119, %s135
      %p137 = scmp.eq.s32.totalorder %s38, 0
      %p138 = por %p136, %p137
      %s139 = ssub.s32 %s32, %s39
      %p140 = scmp.eq.s32.totalorder %s139, 0
      %s142 = sadd.s32 %s141, 1
      %s143 = scalar_select %p140, %s141, %s142
      %p146 = pneg %p140
      %p147 = scmp.eq.s32.totalorder %s32, 1
      %p148 = por %p146, %p147
      %p149 = scmp.ne.s32.totalorder %s141, %s144
      %p150 = scmp.eq.s32.totalorder %s32, 0
      %p151 = por %p149, %p150
      %p152 = scmp.ne.s32.totalorder %s141, %s144
      %p153 = scmp.eq.s32.totalorder %s37, 1
      %p154 = por %p152, %p153
      %p155 = scmp.ne.s32.totalorder %s144, %s145
      %p156 = scmp.eq.s32.totalorder %s37, 0
      %p157 = por %p155, %p156
      %p158 = scmp.ne.s32.totalorder %s144, %s145
      %p159 = scmp.eq.s32.totalorder %s38, 1
      %p160 = por %p158, %p159
      %p162 = scmp.ne.s32.totalorder %s145, %s161
      %p163 = scmp.eq.s32.totalorder %s38, 0
      %p164 = por %p162, %p163
      %p165 = scmp.le.s32.totalorder 1, %s32
      %p166 = scmp.lt.s32.totalorder %s32, 3
      %p167 = pnand %p165, %p166
      %p168 = pneg %p167
      // Predicated region
      $region9: #{tpu_custom_call.1} parent=5 // pred_check
        _
      $region10: #{tpu_custom_call.1} parent=5 // pred_check_branch
        %170 = sbr.rel (%p167) target = $region12
      $region11: #{tpu_custom_call.1} parent=5 // pred_region
        %s171 = ssub.s32 %s32, 1
        // Predicated region
        $region13: #{tpu_custom_call.1} parent=11 // pred_check
          %p172 = pneg %p105
        $region14: #{tpu_custom_call.1} parent=11 // pred_check_branch
          %174 = sbr.rel (%p172) target = $region16
        $region15: #{tpu_custom_call.1} parent=11 // pred_region
          _
        $region16: #{tpu_custom_call.1} parent=11 // pred_fallthru
          _
      $region12: #{tpu_custom_call.1} parent=5 // pred_fallthru
        _
      %p175 = scmp.lt.s32.totalorder %s32, 2
      // Predicated region
      $region17: #{tpu_custom_call.1} parent=5 // pred_check
        %p176 = pneg %p175
      $region18: #{tpu_custom_call.1} parent=5 // pred_check_branch
        %178 = sbr.rel (%p176) target = $region20
      $region19: #{tpu_custom_call.1} parent=5 // pred_region
        // Predicated region
        $region21: #{tpu_custom_call.1} parent=19 // pred_check
          %p179 = pneg %p52
        $region22: #{tpu_custom_call.1} parent=19 // pred_check_branch
          %181 = sbr.rel (%p179) target = $region24
        $region23: #{tpu_custom_call.1} parent=19 // pred_region
          %s182 = smul.u32 2, %s32
          %p183 = scmp.lt.s32.totalorder %s182, 3
          %s184 = scalar_select %p183, %s182, 3
          %s185 = smul.addr %s184, 4
          %s186 = smul.addr %s185, 8
          %s187 = scalar_lea.vmem %s2, %s186
          %s188 = smul.u32 2, %s32
        $region24: #{tpu_custom_call.1} parent=19 // pred_fallthru
          _
        // Predicated region
        $region25: #{tpu_custom_call.1} parent=19 // pred_check
          %p189 = pneg %p78
        $region26: #{tpu_custom_call.1} parent=19 // pred_check_branch
          %191 = sbr.rel (%p189) target = $region28
        $region27: #{tpu_custom_call.1} parent=19 // pred_region
          %s192 = smul.u32 2, %s32
          %p193 = scmp.lt.s32.totalorder %s192, 3
          %s194 = scalar_select %p193, %s192, 3
          %s195 = smul.addr %s194, 6
          %s196 = smul.addr %s195, 8
          %s197 = scalar_lea.vmem %s3, %s196
          %s198 = smul.u32 2, %s32
        $region28: #{tpu_custom_call.1} parent=19 // pred_fallthru
          _
      $region20: #{tpu_custom_call.1} parent=5 // pred_fallthru
        _
      %p199 = scmp.le.s32.totalorder 1, %s32
      %p200 = scmp.lt.s32.totalorder %s32, 3
      %p201 = pnand %p199, %p200
      %p202 = pneg %p201
      // Predicated region
      $region29: #{tpu_custom_call.1} parent=5 // pred_check
        _
      $region30: #{tpu_custom_call.1} parent=5 // pred_check_branch
        %204 = sbr.rel (%p201) target = $region32
      $region31: #{tpu_custom_call.1} parent=5 // pred_region
        %s205 = ssub.s32 %s32, 1
        %s206 = smul.u32 2, %s37
        %p207 = scmp.lt.s32.totalorder %s206, 3
        %s208 = scalar_select %p207, %s206, 3
        %s209 = smul.addr %s208, 4
        %s210 = smul.addr %s209, 8
        %s211 = scalar_lea.vmem %s2, %s210
        %p212 = pneg %p58
        %p213 = pneg %p55
        %s214 = smul.u32 2, %s37
        %p215 = scmp.lt.s32.totalorder %s214, 3
        %s216 = scalar_select %p215, %s214, 3
        %s217 = smul.addr %s216, 6
        %s218 = smul.addr %s217, 8
        %s219 = scalar_lea.vmem %s3, %s218
        %p220 = pneg %p84
        %p221 = pneg %p81
        %p222 = pneg %p105
        %p223 = pneg %p102
        %p224 = pneg %p131
        %p225 = pneg %p128
        %s226 = sand.u32 %s118, 1
        %s227 = scalar_lea.sflag [#allocation6], %s226
        %s228 = sand.u32 %s118, 1
        %s229 = smul.addr %s228, 2
        %s230 = scalar_lea.vmem [#allocation5], %s229
        %p231 = pneg %p157
        %p232 = pneg %p154
        %s233 = sand.u32 %s144, 1
        %s234 = scalar_lea.sflag [#allocation8], %s233
        %s235 = sand.u32 %s144, 1
        %s236 = smul.addr %s235, 2
        %s237 = scalar_lea.vmem [#allocation7], %s236
        %s238 = smul.u32 2, %s37
        %p239 = scmp.lt.s32.totalorder %s238, 3
        %s240 = scalar_select %p239, %s238, 3
        %s241 = smul.addr %s240, 4
        %s242 = smul.addr %s241, 8
        %s243 = scalar_lea.vmem %s2, %s242
        %s244 = smul.u32 2, %s37
        %s245 = smul.u32 2, %s37
        %p246 = scmp.lt.s32.totalorder %s245, 3
        %s247 = scalar_select %p246, %s245, 3
        %s248 = smul.addr %s247, 6
        %s249 = smul.addr %s248, 8
        %s250 = scalar_lea.vmem %s3, %s249
        %s251 = smul.u32 2, %s37
        %s252 = smul.u32 %s37, 2
        %v253 = vld [vmem:[%s4] sm:$0xff]
        %v254 = vld [vmem:[%s4 + $0x8] sm:$0xff]
        %v255 = vld [vmem:[%s4 + $0x10] sm:$0xff]
        %v256 = vld [vmem:[%s4 + $0x18] sm:$0xff]
        %v257 = vld [vmem:[%s243] sm:$0xff]
        %v258 = vld [vmem:[%s243 + $0x8] sm:$0xff]
        %v259 = vld [vmem:[%s243 + $0x10] sm:$0xff]
        %v260 = vld [vmem:[%s243 + $0x18] sm:$0xff]
        %261 = vxpose.xlu0.b32.start [1/16] %v257, 128
        %262 = vxpose.xlu0.b32.cont [2/16] %v258, 128
        %263 = vxpose.xlu0.b32.cont [3/16] %v259, 128
        %264 = vxpose.xlu0.b32.cont [4/16] %v260, 128
        %265 = vxpose.xlu0.b32.cont [5/16] 0.0, 128
        %266 = vxpose.xlu0.b32.cont [6/16] 0.0, 128
        %267 = vxpose.xlu0.b32.cont [7/16] 0.0, 128
        %268 = vxpose.xlu0.b32.cont [8/16] 0.0, 128
        %269 = vxpose.xlu0.b32.cont [9/16] 0.0, 128
        %270 = vxpose.xlu0.b32.cont [10/16] 0.0, 128
        %271 = vxpose.xlu0.b32.cont [11/16] 0.0, 128
        %272 = vxpose.xlu0.b32.cont [12/16] 0.0, 128
        %273 = vxpose.xlu0.b32.cont [13/16] 0.0, 128
        %274 = vxpose.xlu0.b32.cont [14/16] 0.0, 128
        %275 = vxpose.xlu0.b32.cont [15/16] 0.0, 128
        %276 = vxpose.xlu0.b32.end [16/16] 0.0, 128
        %v277 = vpop.trf.xlu0
        %v278 = vpop.trf.xlu0
        %v279 = vpop.trf.xlu0
        %v280 = vpop.trf.xlu0
        %v281 = vpop.trf.xlu0
        %v282 = vpop.trf.xlu0
        %v283 = vpop.trf.xlu0
        %v284 = vpop.trf.xlu0
        %v285 = vpop.trf.xlu0
        %v286 = vpop.trf.xlu0
        %v287 = vpop.trf.xlu0
        %v288 = vpop.trf.xlu0
        %v289 = vpop.trf.xlu0
        %v290 = vpop.trf.xlu0
        %v291 = vpop.trf.xlu0
        %v292 = vpop.trf.xlu0
        %s293 = scalar_lea.vmem %s243, 32
        %v294 = vld [vmem:[%s293] sm:$0xff]
        %v295 = vld [vmem:[%s293 + $0x8] sm:$0xff]
        %v296 = vld [vmem:[%s293 + $0x10] sm:$0xff]
        %v297 = vld [vmem:[%s293 + $0x18] sm:$0xff]
        %298 = vxpose.xlu0.b32.start [1/16] %v294, 128
        %299 = vxpose.xlu0.b32.cont [2/16] %v295, 128
        %300 = vxpose.xlu0.b32.cont [3/16] %v296, 128
        %301 = vxpose.xlu0.b32.cont [4/16] %v297, 128
        %302 = vxpose.xlu0.b32.cont [5/16] 0.0, 128
        %303 = vxpose.xlu0.b32.cont [6/16] 0.0, 128
        %304 = vxpose.xlu0.b32.cont [7/16] 0.0, 128
        %305 = vxpose.xlu0.b32.cont [8/16] 0.0, 128
        %306 = vxpose.xlu0.b32.cont [9/16] 0.0, 128
        %307 = vxpose.xlu0.b32.cont [10/16] 0.0, 128
        %308 = vxpose.xlu0.b32.cont [11/16] 0.0, 128
        %309 = vxpose.xlu0.b32.cont [12/16] 0.0, 128
        %310 = vxpose.xlu0.b32.cont [13/16] 0.0, 128
        %311 = vxpose.xlu0.b32.cont [14/16] 0.0, 128
        %312 = vxpose.xlu0.b32.cont [15/16] 0.0, 128
        %313 = vxpose.xlu0.b32.end [16/16] 0.0, 128
        %v314 = vpop.trf.xlu0
        %v315 = vpop.trf.xlu0
        %v316 = vpop.trf.xlu0
        %v317 = vpop.trf.xlu0
        %v318 = vpop.trf.xlu0
        %v319 = vpop.trf.xlu0
        %v320 = vpop.trf.xlu0
        %v321 = vpop.trf.xlu0
        %v322 = vpop.trf.xlu0
        %v323 = vpop.trf.xlu0
        %v324 = vpop.trf.xlu0
        %v325 = vpop.trf.xlu0
        %v326 = vpop.trf.xlu0
        %v327 = vpop.trf.xlu0
        %v328 = vpop.trf.xlu0
        %v329 = vpop.trf.xlu0
        %vm330 = vcmask 261120
        %v332 = vsel %vm330, %v277, 0
        %v335 = vsel %vm330, %v314, 0
        %337 = vmatpush.msra.mxu0 0.0
        %338 = vmatpush.msra.mxu0 0.0
        %339 = vmatpush.msra.mxu0 0.0
        %340 = vmatpush.msra.mxu0 0.0
        %341 = vmatpush.msra.mxu0 0.0
        %342 = vmatpush.msra.mxu0 0.0
        %343 = vmatpush.msra.mxu0 0.0
        %344 = vmatpush.msra.mxu0 0.0
        %345 = vmatpush.msra.mxu0 0.0
        %346 = vmatpush.msra.mxu0 0.0
        %347 = vmatpush.msra.mxu0 0.0
        %348 = vmatpush.msra.mxu0 0.0
        %349 = vmatpush.msra.mxu0 %v256
        %350 = vmatpush.msra.mxu0 %v255
        %351 = vmatpush.msra.mxu0 %v254
        %352 = vmatpush.msra.mxu0 %v253
        %353 = vmatmul.f32.gmra.mxu0 %v332
        %v354 = vpop.f32.mrf.mxu0
        %v355 = vadd.f32 0.0, %v354
        %356 = vmatmul.f32.gmra.mxu0 %v335
        %v357 = vpop.f32.mrf.mxu0
        %v358 = vadd.f32 0.0, %v357
        %359 = vdwg.mxu0
        %v360 = vlaneseq
        %v361 = vshrl.u32 %v360, 7
        %v362 = vlaneseq
        %v363 = vand.u32 %v362, 127
        %s364 = sld [smem:[#allocation3 + %s252]]
        %s365 = sld [smem:[#allocation4 + %s252]]
        %v366 = vld [vmem:[%s250] sm:$0xff]
        %v367 = vld [vmem:[%s250 + $0x8] sm:$0xff]
        %v368 = vld [vmem:[%s250 + $0x10] sm:$0xff]
        %v369 = vld [vmem:[%s250 + $0x18] sm:$0xff]
        %v370 = vld [vmem:[%s250 + $0x20] sm:$0xff]
        %v371 = vld [vmem:[%s250 + $0x28] sm:$0xff]
        %vm372 = vcmask 392192
        %v374 = vsel %vm372, %v355, 0
        %376 = vmatpush.msra.mxu0 0.0
        %377 = vmatpush.msra.mxu0 0.0
        %378 = vmatpush.msra.mxu0 0.0
        %379 = vmatpush.msra.mxu0 0.0
        %380 = vmatpush.msra.mxu0 0.0
        %381 = vmatpush.msra.mxu0 0.0
        %382 = vmatpush.msra.mxu0 0.0
        %383 = vmatpush.msra.mxu0 0.0
        %384 = vmatpush.msra.mxu0 0.0
        %385 = vmatpush.msra.mxu0 0.0
        %386 = vmatpush.msra.mxu0 %v371
        %387 = vmatpush.msra.mxu0 %v370
        %388 = vmatpush.msra.mxu0 %v369
        %389 = vmatpush.msra.mxu0 %v368
        %390 = vmatpush.msra.mxu0 %v367
        %391 = vmatpush.msra.mxu0 %v366
        %392 = vmatmul.f32.gmra.mxu0 %v374
        %v393 = vpop.f32.mrf.mxu0
        %v394 = vadd.f32 0.0, %v393
        %395 = vdwg.mxu0
        %v396 = vstv %s364
        %vm397 = vcmp.lt.s32.totalorder %v361, %v396
        %v398 = vstv %s365
        %vm399 = vcmp.lt.s32.totalorder %v363, %v398
        %vm400 = vmand %vm397, %vm399
        %v401 = vtanh.pop %v394
        %v402 = vsel %vm400, %v401, -inf
        %vm403 = vcmask 97280
        %v404 = vsel %vm403, %v402, -inf
        %405 = vmax.xlane.f32.xlu0 %v404
        %v406 = vpop.xlane.xlu0 %405
        %v407 = vrot.slane %v406, 4
        %v408 = vmax.f32 %v406, %v407
        %v409 = vrot.slane %v408, 2
        %v410 = vmax.f32 %v408, %v409
        %v411 = vrot.slane %v410, 1
        %v412 = vmax.f32 %v410, %v411
        %v413 = vsub.f32 %v406, %v412
        %v414 = vmul.f32 %v413, 1.442695
        %v415 = vpow.pop %v414
        %v416 = vrot.slane %v415, 4
        %v417 = vadd.f32 %v415, %v416
        %v418 = vrot.slane %v417, 2
        %v419 = vadd.f32 %v417, %v418
        %v420 = vrot.slane %v419, 1
        %v421 = vadd.f32 %v419, %v420
        %v422 = vrcp.pop %v421
        %v423 = vmul.f32 %v421, %v422
        %v424 = vsub.f32 1.0, %v423
        %v425 = vmul.f32 %v422, %v424
        %v426 = vadd.f32 %v422, %v425
        %vm427 = vweird.f32 %v421
        %vm428 = vweird.f32 %v422
        %vm429 = vmor %vm427, %vm428
        %v430 = vsel %vm429, %v422, %v426
        %v431 = vand.u32 2147483647, %v421
        %vm432 = vcmp.eq.f32.partialorder %v431, 8.507059e+37
        %v433 = vand.u32 %v421, 2147483648
        %v434 = vor.u32 1.1754944e-38, %v433
        %v435 = vsel %vm432, %v434, %v430
        %v436 = vmul.f32 %v415, %v435
        %v437 = vmul.f32 %v277, %v436
        %v438 = vsel %vm330, %v437, 0.0
        %v439 = vrot.slane %v438, 4
        %v440 = vadd.f32 %v438, %v439
        %v441 = vrot.slane %v440, 2
        %v442 = vadd.f32 %v440, %v441
        %v443 = vrot.slane %v442, 1
        %v444 = vadd.f32 %v442, %v443
        %v445 = vrot.slane %v404, 4
        %v446 = vmax.f32 %v404, %v445
        %v447 = vrot.slane %v446, 2
        %v448 = vmax.f32 %v446, %v447
        %v449 = vrot.slane %v448, 1
        %v450 = vmax.f32 %v448, %v449
        %v451 = vsel %vm403, %v450, -inf
        %452 = vmax.xlane.f32.xlu0 %v451
        %v453 = vpop.xlane.xlu0 %452
        %v454 = vsub.f32 %v450, %v453
        %v455 = vmul.f32 %v454, 1.442695
        %v456 = vpow.pop %v455
        %v457 = vsel %vm403, %v456, 0.0
        %458 = vadd.xlane.f32.xlu0 %v457
        %v459 = vpop.xlane.xlu0 %458
        %v460 = vrcp.pop %v459
        %v461 = vmul.f32 %v459, %v460
        %v462 = vsub.f32 1.0, %v461
        %v463 = vmul.f32 %v460, %v462
        %v464 = vadd.f32 %v460, %v463
        %vm465 = vweird.f32 %v459
        %vm466 = vweird.f32 %v460
        %vm467 = vmor %vm465, %vm466
        %v468 = vsel %vm467, %v460, %v464
        %v469 = vand.u32 2147483647, %v459
        %vm470 = vcmp.eq.f32.partialorder %v469, 8.507059e+37
        %v471 = vand.u32 %v459, 2147483648
        %v472 = vor.u32 1.1754944e-38, %v471
        %v473 = vsel %vm470, %v472, %v468
        %v474 = vmul.f32 %v456, %v473
        %v476 = vsel %vm403, %v474, 0
        %v479 = vsel %vm403, %v366, 0
        %v482 = vsel %vm403, %v367, 0
        %v485 = vsel %vm403, %v368, 0
        %v488 = vsel %vm403, %v369, 0
        %v491 = vsel %vm403, %v370, 0
        %v494 = vsel %vm403, %v371, 0
        %496 = vmatpush.xpose.msra.mxu0 0.0
        %497 = vmatpush.xpose.msra.mxu0 0.0
        %498 = vmatpush.xpose.msra.mxu0 0.0
        %499 = vmatpush.xpose.msra.mxu0 0.0
        %500 = vmatpush.xpose.msra.mxu0 0.0
        %501 = vmatpush.xpose.msra.mxu0 0.0
        %502 = vmatpush.xpose.msra.mxu0 0.0
        %503 = vmatpush.xpose.msra.mxu0 0.0
        %504 = vmatpush.xpose.msra.mxu0 0.0
        %505 = vmatpush.xpose.msra.mxu0 0.0
        %506 = vmatpush.xpose.msra.mxu0 %v494
        %507 = vmatpush.xpose.msra.mxu0 %v491
        %508 = vmatpush.xpose.msra.mxu0 %v488
        %509 = vmatpush.xpose.msra.mxu0 %v485
        %510 = vmatpush.xpose.msra.mxu0 %v482
        %511 = vmatpush.xpose.msra.mxu0 %v479
        %512 = vmatmul.f32.gmra.mxu0 %v476
        %v513 = vpop.f32.mrf.mxu0
        %v514 = vadd.f32 0.0, %v513
        %515 = vdwg.mxu0
        %s516 = sadd.s32 %s252, 1
        %s517 = sld [smem:[#allocation3 + %s516]]
        %s518 = sld [smem:[#allocation4 + %s516]]
        %s519 = scalar_lea.vmem %s250, 48
        %v520 = vld [vmem:[%s519] sm:$0xff]
        %v521 = vld [vmem:[%s519 + $0x8] sm:$0xff]
        %v522 = vld [vmem:[%s519 + $0x10] sm:$0xff]
        %v523 = vld [vmem:[%s519 + $0x18] sm:$0xff]
        %v524 = vld [vmem:[%s519 + $0x20] sm:$0xff]
        %v525 = vld [vmem:[%s519 + $0x28] sm:$0xff]
        %v527 = vsel %vm372, %v358, 0
        %529 = vmatpush.msra.mxu0 0.0
        %530 = vmatpush.msra.mxu0 0.0
        %531 = vmatpush.msra.mxu0 0.0
        %532 = vmatpush.msra.mxu0 0.0
        %533 = vmatpush.msra.mxu0 0.0
        %534 = vmatpush.msra.mxu0 0.0
        %535 = vmatpush.msra.mxu0 0.0
        %536 = vmatpush.msra.mxu0 0.0
        %537 = vmatpush.msra.mxu0 0.0
        %538 = vmatpush.msra.mxu0 0.0
        %539 = vmatpush.msra.mxu0 %v525
        %540 = vmatpush.msra.mxu0 %v524
        %541 = vmatpush.msra.mxu0 %v523
        %542 = vmatpush.msra.mxu0 %v522
        %543 = vmatpush.msra.mxu0 %v521
        %544 = vmatpush.msra.mxu0 %v520
        %545 = vmatmul.f32.gmra.mxu0 %v527
        %v546 = vpop.f32.mrf.mxu0
        %v547 = vadd.f32 0.0, %v546
        %548 = vdwg.mxu0
        %v549 = vstv %s517
        %vm550 = vcmp.lt.s32.totalorder %v361, %v549
        %v551 = vstv %s518
        %vm552 = vcmp.lt.s32.totalorder %v363, %v551
        %vm553 = vmand %vm550, %vm552
        %v554 = vtanh.pop %v547
        %v555 = vsel %vm553, %v554, -inf
        %v556 = vsel %vm403, %v555, -inf
        %557 = vmax.xlane.f32.xlu0 %v556
        %v558 = vpop.xlane.xlu0 %557
        %v559 = vrot.slane %v558, 4
        %v560 = vmax.f32 %v558, %v559
        %v561 = vrot.slane %v560, 2
        %v562 = vmax.f32 %v560, %v561
        %v563 = vrot.slane %v562, 1
        %v564 = vmax.f32 %v562, %v563
        %v565 = vsub.f32 %v558, %v564
        %v566 = vmul.f32 %v565, 1.442695
        %v567 = vpow.pop %v566
        %v568 = vrot.slane %v567, 4
        %v569 = vadd.f32 %v567, %v568
        %v570 = vrot.slane %v569, 2
        %v571 = vadd.f32 %v569, %v570
        %v572 = vrot.slane %v571, 1
        %v573 = vadd.f32 %v571, %v572
        %v574 = vrcp.pop %v573
        %v575 = vmul.f32 %v573, %v574
        %v576 = vsub.f32 1.0, %v575
        %v577 = vmul.f32 %v574, %v576
        %v578 = vadd.f32 %v574, %v577
        %vm579 = vweird.f32 %v573
        %vm580 = vweird.f32 %v574
        %vm581 = vmor %vm579, %vm580
        %v582 = vsel %vm581, %v574, %v578
        %v583 = vand.u32 2147483647, %v573
        %vm584 = vcmp.eq.f32.partialorder %v583, 8.507059e+37
        %v585 = vand.u32 %v573, 2147483648
        %v586 = vor.u32 1.1754944e-38, %v585
        %v587 = vsel %vm584, %v586, %v582
        %v588 = vmul.f32 %v567, %v587
        %v589 = vmul.f32 %v314, %v588
        %v590 = vsel %vm330, %v589, 0.0
        %v591 = vrot.slane %v590, 4
        %v592 = vadd.f32 %v590, %v591
        %v593 = vrot.slane %v592, 2
        %v594 = vadd.f32 %v592, %v593
        %v595 = vrot.slane %v594, 1
        %v596 = vadd.f32 %v594, %v595
        %v597 = vrot.slane %v556, 4
        %v598 = vmax.f32 %v556, %v597
        %v599 = vrot.slane %v598, 2
        %v600 = vmax.f32 %v598, %v599
        %v601 = vrot.slane %v600, 1
        %v602 = vmax.f32 %v600, %v601
        %v603 = vsel %vm403, %v602, -inf
        %604 = vmax.xlane.f32.xlu0 %v603
        %v605 = vpop.xlane.xlu0 %604
        %v606 = vsub.f32 %v602, %v605
        %v607 = vmul.f32 %v606, 1.442695
        %v608 = vpow.pop %v607
        %v609 = vsel %vm403, %v608, 0.0
        %610 = vadd.xlane.f32.xlu0 %v609
        %v611 = vpop.xlane.xlu0 %610
        %v612 = vrcp.pop %v611
        %v613 = vmul.f32 %v611, %v612
        %v614 = vsub.f32 1.0, %v613
        %v615 = vmul.f32 %v612, %v614
        %v616 = vadd.f32 %v612, %v615
        %vm617 = vweird.f32 %v611
        %vm618 = vweird.f32 %v612
        %vm619 = vmor %vm617, %vm618
        %v620 = vsel %vm619, %v612, %v616
        %v621 = vand.u32 2147483647, %v611
        %vm622 = vcmp.eq.f32.partialorder %v621, 8.507059e+37
        %v623 = vand.u32 %v611, 2147483648
        %v624 = vor.u32 1.1754944e-38, %v623
        %v625 = vsel %vm622, %v624, %v620
        %v626 = vmul.f32 %v608, %v625
        %v628 = vsel %vm403, %v626, 0
        %v631 = vsel %vm403, %v520, 0
        %v634 = vsel %vm403, %v521, 0
        %v637 = vsel %vm403, %v522, 0
        %v640 = vsel %vm403, %v523, 0
        %v643 = vsel %vm403, %v524, 0
        %v646 = vsel %vm403, %v525, 0
        %648 = vmatpush.xpose.msra.mxu0 0.0
        %649 = vmatpush.xpose.msra.mxu0 0.0
        %650 = vmatpush.xpose.msra.mxu0 0.0
        %651 = vmatpush.xpose.msra.mxu0 0.0
        %652 = vmatpush.xpose.msra.mxu0 0.0
        %653 = vmatpush.xpose.msra.mxu0 0.0
        %654 = vmatpush.xpose.msra.mxu0 0.0
        %655 = vmatpush.xpose.msra.mxu0 0.0
        %656 = vmatpush.xpose.msra.mxu0 0.0
        %657 = vmatpush.xpose.msra.mxu0 0.0
        %658 = vmatpush.xpose.msra.mxu0 %v646
        %659 = vmatpush.xpose.msra.mxu0 %v643
        %660 = vmatpush.xpose.msra.mxu0 %v640
        %661 = vmatpush.xpose.msra.mxu0 %v637
        %662 = vmatpush.xpose.msra.mxu0 %v634
        %663 = vmatpush.xpose.msra.mxu0 %v631
        %664 = vmatmul.f32.gmra.mxu0 %v628
        %v665 = vpop.f32.mrf.mxu0
        %v666 = vadd.f32 0.0, %v665
        %667 = vdwg.mxu0
        %vm668 = vcmask 1040384
        %v669 = vsel %vm668, %v444, %v596
        %v671 = vrot.slane %v666, 7
        %v673 = vsel %vm668, %v514, %v671
        %vm674 = vcmask 254976
        %675 = vst.msk [vmem:[%s230] sm:$0x3] %vm674, %v669
        %vm676 = vcmask 386048
        %677 = vst.msk [vmem:[%s237] sm:$0x3] %vm676, %v673
        %s678 = sand.u32 %s118, 1
        %s679 = scalar_lea.sflag [#allocation6], %s678
        %s680 = sand.u32 %s118, 1
        %s681 = smul.addr %s680, 2
        %s682 = scalar_lea.vmem [#allocation5], %s681
        %s683 = sand.u32 %s144, 1
        %s684 = scalar_lea.sflag [#allocation8], %s683
        %s685 = sand.u32 %s144, 1
        %s686 = smul.addr %s685, 2
        %s687 = scalar_lea.vmem [#allocation7], %s686
        // Predicated region
        $region33: #{tpu_custom_call.1} parent=31 // pred_check
          %p688 = pneg %p128
        $region34: #{tpu_custom_call.1} parent=31 // pred_check_branch
          %690 = sbr.rel (%p688) target = $region36
        $region35: #{tpu_custom_call.1} parent=31 // pred_region
          %692 = vsyncadd %s679, 0
          %s693 = smul.addr %s37, 2
          %s694 = scalar_lea.hbm %s5, %s693
          %s696 = sshll.u32 %s682, 4
          %s697 = int_to_ptr.vmem [resolvable:$true] %s696
          %s698 = sshll.u32 %s694, 4
          %s699 = int_to_ptr.hbm [resolvable:$true] %s698
          %701 = dma.vmem_to_hbm [thread:$0]  %s697, 32, %s699, %s679
        $region36: #{tpu_custom_call.1} parent=31 // pred_fallthru
          _
        // Predicated region
        $region37: #{tpu_custom_call.1} parent=31 // pred_check
          %p702 = pneg %p154
        $region38: #{tpu_custom_call.1} parent=31 // pred_check_branch
          %704 = sbr.rel (%p702) target = $region40
        $region39: #{tpu_custom_call.1} parent=31 // pred_region
          %706 = vsyncadd %s684, 0
          %s707 = smul.addr %s37, 2
          %s708 = scalar_lea.hbm %s6, %s707
          %s710 = sshll.u32 %s687, 4
          %s711 = int_to_ptr.vmem [resolvable:$true] %s710
          %s712 = sshll.u32 %s708, 4
          %s713 = int_to_ptr.hbm [resolvable:$true] %s712
          %715 = dma.vmem_to_hbm [thread:$0]  %s711, 32, %s713, %s684
        $region40: #{tpu_custom_call.1} parent=31 // pred_fallthru
          _
      $region32: #{tpu_custom_call.1} parent=5 // pred_fallthru
        _
      %p716 = scmp.le.s32.totalorder 2, %s32
      // Predicated region
      $region41: #{tpu_custom_call.1} parent=5 // pred_check
        %p717 = pneg %p716
      $region42: #{tpu_custom_call.1} parent=5 // pred_check_branch
        %719 = sbr.rel (%p717) target = $region44
      $region43: #{tpu_custom_call.1} parent=5 // pred_region
        %s720 = ssub.s32 %s32, 2
        // Predicated region
        $region45: #{tpu_custom_call.1} parent=43 // pred_check
          %p721 = pneg %p134
        $region46: #{tpu_custom_call.1} parent=43 // pred_check_branch
          %723 = sbr.rel (%p721) target = $region48
        $region47: #{tpu_custom_call.1} parent=43 // pred_region
          %s724 = sand.u32 %s119, 1
          %s725 = scalar_lea.sflag [#allocation6], %s724
          %s726 = sand.u32 %s119, 1
          %s727 = smul.addr %s726, 2
          %s728 = scalar_lea.vmem [#allocation5], %s727
          %730 = dma.done %s725, 32
        $region48: #{tpu_custom_call.1} parent=43 // pred_fallthru
          _
        // Predicated region
        $region49: #{tpu_custom_call.1} parent=43 // pred_check
          %p731 = pneg %p160
        $region50: #{tpu_custom_call.1} parent=43 // pred_check_branch
          %733 = sbr.rel (%p731) target = $region52
        $region51: #{tpu_custom_call.1} parent=43 // pred_region
          %s734 = sand.u32 %s145, 1
          %s735 = scalar_lea.sflag [#allocation8], %s734
          %s736 = sand.u32 %s145, 1
          %s737 = smul.addr %s736, 2
          %s738 = scalar_lea.vmem [#allocation7], %s737
          %740 = dma.done %s735, 32
        $region52: #{tpu_custom_call.1} parent=43 // pred_fallthru
          _
      $region44: #{tpu_custom_call.1} parent=5 // pred_fallthru
        _
    $region6: #{tpu_custom_call.1} parent=1 // loop_footer
      %s36 = sadd.s32 1, %s32
    $region7: #{tpu_custom_call.1} parent=1 // loop_footer_branch
      %31 = sbr.rel target = $region3
    $region8: #{tpu_custom_call.1} parent=1 // loop_exit
      _
    %741 = vsyncpa [#allocation6], 1
    %s742 = scalar_lea.sflag [#allocation6], 1
    %743 = vsyncpa %s742, 1
    %744 = vsyncpa [#allocation8], 1
    %s745 = scalar_lea.sflag [#allocation8], 1
    %746 = vsyncpa %s745, 1

</llo_original>
